<compile_context>
chip_gen: v7x
topology: tpu7x:2x2x1
jax: 0.10.0
libtpu: 0.0.40
codegen_flags: <defaults>
</compile_context>

<pallas_src>
import functools
import math

import jax
import jax.numpy as jnp
from jax.experimental import pallas as pl
from jax.experimental.pallas import tpu as pltpu

EPS = 1e-5


def _round_up(x, m):
    return (x + m - 1) // m * m


@functools.lru_cache(maxsize=None)
def _vmem_budget():
    """(target bytes per streamed block, scoped VMEM limit) per TPU generation."""
    try:
        cap = pltpu.get_tpu_info().vmem_capacity_bytes
    except Exception:
        cap = 64 << 20
    if cap >= (100 << 20):          # v5e / v6e: 128 MiB physical VMEM
        return 8 << 20, 64 << 20
    return 4 << 20, 32 << 20        # v7x: 64 MiB physical VMEM (or unknown)


# --------------------------------------------------------------------------
# LayerNorm: per-row normalization over the last dim D
# --------------------------------------------------------------------------
def _layernorm_kernel(x_ref, g_ref, b_ref, o_ref, *, inv_d):
    x = x_ref[...].astype(jnp.float32)
    mean = jnp.sum(x, axis=-1, keepdims=True) * inv_d
    var = jnp.sum(x * x, axis=-1, keepdims=True) * inv_d - mean * mean
    inv = jax.lax.rsqrt(jnp.maximum(var, 0.0) + EPS)
    y = (x - mean) * inv * g_ref[...] + b_ref[...]
    o_ref[...] = y.astype(o_ref.dtype)


def layernorm_pallas(x2d, gamma, beta):
    rows, d = x2d.shape
    target_bytes, vmem_limit = _vmem_budget()
    itemsize = x2d.dtype.itemsize
    sub = max(8, 32 // itemsize)                       # sublane multiple (f32:8, bf16:16)

    t_cap = max(sub, (target_bytes // (d * itemsize)) // sub * sub)
    steps = max(1, math.ceil(rows / t_cap))
    tile = _round_up(math.ceil(rows / steps), sub)
    rows_p = steps * tile

    xw = x2d if rows_p == rows else jnp.pad(x2d, ((0, rows_p - rows), (0, 0)))

    cost = pl.CostEstimate(flops=7 * rows_p * d,
                           transcendentals=rows_p,
                           bytes_accessed=2 * rows_p * d * itemsize)
    out = pl.pallas_call(
        functools.partial(_layernorm_kernel, inv_d=1.0 / d),
        out_shape=jax.ShapeDtypeStruct((rows_p, d), x2d.dtype),
        grid_spec=pltpu.PrefetchScalarGridSpec(
            num_scalar_prefetch=0,
            grid=(steps,),
            in_specs=[
                pl.BlockSpec((tile, d), lambda i: (i, 0)),
                pl.BlockSpec((1, d), lambda i: (0, 0)),
                pl.BlockSpec((1, d), lambda i: (0, 0)),
            ],
            out_specs=pl.BlockSpec((tile, d), lambda i: (i, 0)),
        ),
        compiler_params=pltpu.CompilerParams(
            dimension_semantics=("parallel",),
            vmem_limit_bytes=vmem_limit),
        cost_estimate=cost,
    )(xw, gamma, beta)
    return out[:rows] if rows_p != rows else out


# --------------------------------------------------------------------------
# BatchNorm (training-mode batch statistics), two streaming passes.
# Pass 1: per-lane sum / sum-of-squares, 2 accumulator banks (one per TC on v7x).
# Pass 2: fold partials + channel groups, compute scale/shift, apply (single FMA).
# --------------------------------------------------------------------------
def _bn_stats_kernel(x_ref, sum_ref, sq_ref):
    @pl.when(pl.program_id(1) == 0)
    def _():
        sum_ref[...] = jnp.zeros_like(sum_ref)
        sq_ref[...] = jnp.zeros_like(sq_ref)

    x = x_ref[...].astype(jnp.float32)
    sum_ref[...] += jnp.sum(x, axis=0, keepdims=True)[None]
    sq_ref[...] += jnp.sum(x * x, axis=0, keepdims=True)[None]


def _bn_apply_kernel(sum_ref, sq_ref, g_ref, b_ref, x_ref, o_ref, *, inv_n, rep, d):
    # Fold the two TensorCore partials, then fold the `rep` channel groups packed
    # into each 128-lane row of the lane-dense layout (rep == 1 in natural layout).
    # A handful of single-vreg ops per grid step: negligible against the streamed
    # block, and safe under "parallel" semantics (no cross-step scratch).
    s = jnp.sum(sum_ref[...], axis=0)            # (1, L)
    q = jnp.sum(sq_ref[...], axis=0)
    tot_s, tot_q = s, q
    for g in range(1, rep):
        tot_s = tot_s + pltpu.roll(s, shift=g * d, axis=1)
        tot_q = tot_q + pltpu.roll(q, shift=g * d, axis=1)
    mean = tot_s * inv_n
    var = jnp.maximum(tot_q * inv_n - mean * mean, 0.0)
    inv = jax.lax.rsqrt(var + EPS)
    scale = g_ref[...] * inv
    shift = b_ref[...] - mean * scale

    x = x_ref[...].astype(jnp.float32)
    o_ref[...] = (x * scale + shift).astype(o_ref.dtype)


def batchnorm_pallas(x2d, gamma, beta):
    rows, d = x2d.shape
    target_bytes, vmem_limit = _vmem_budget()
    itemsize = x2d.dtype.itemsize
    sub = max(8, 32 // itemsize)

    # Lane-dense layout when d is a small power-of-two divisor of 128.
    dense = (d < 128) and (128 % d == 0) and (d >= 8)
    rep = (128 // d) if dense else 1
    lane_w = 128 if dense else d

    r_min = math.ceil(rows / rep)                      # rows of the working layout
    t_cap = max(sub, (target_bytes // (lane_w * itemsize)) // sub * sub)
    steps = max(1, math.ceil(r_min / (2 * t_cap)))     # 2-way split for the stats pass
    tile = _round_up(math.ceil(r_min / (2 * steps)), sub)
    r_p = 2 * steps * tile
    rows_p = r_p * rep

    xw = x2d if rows_p == rows else jnp.pad(x2d, ((0, rows_p - rows), (0, 0)))
    if dense:
        xw = xw.reshape(r_p, 128)
        gamma = jnp.tile(gamma, (1, rep))              # static param prep, lane-tiled
        beta = jnp.tile(beta, (1, rep))

    # ---- pass 1: reduction --------------------------------------------------
    stats_cost = pl.CostEstimate(flops=3 * r_p * lane_w, transcendentals=0,
                                 bytes_accessed=r_p * lane_w * itemsize)
    sums, sqs = pl.pallas_call(
        _bn_stats_kernel,
        out_shape=(jax.ShapeDtypeStruct((2, 1, lane_w), jnp.float32),
                   jax.ShapeDtypeStruct((2, 1, lane_w), jnp.float32)),
        grid_spec=pltpu.PrefetchScalarGridSpec(
            num_scalar_prefetch=0,
            grid=(2, steps),
            in_specs=[pl.BlockSpec((tile, lane_w),
                                   lambda c, j: (c * steps + j, 0))],
            out_specs=(pl.BlockSpec((1, 1, lane_w), lambda c, j: (c, 0, 0)),
                       pl.BlockSpec((1, 1, lane_w), lambda c, j: (c, 0, 0))),
        ),
        compiler_params=pltpu.CompilerParams(
            dimension_semantics=("parallel", "arbitrary"),
            vmem_limit_bytes=vmem_limit),
        cost_estimate=stats_cost,
    )(xw)

    # ---- pass 2: fused scale/shift + normalize ------------------------------
    n_tiles = r_p // tile
    apply_cost = pl.CostEstimate(flops=2 * r_p * lane_w,
                                 transcendentals=n_tiles * lane_w,
                                 bytes_accessed=2 * r_p * lane_w * itemsize)
    out = pl.pallas_call(
        functools.partial(_bn_apply_kernel, inv_n=1.0 / rows, rep=rep, d=d),
        out_shape=jax.ShapeDtypeStruct((r_p, lane_w), x2d.dtype),
        grid_spec=pltpu.PrefetchScalarGridSpec(
            num_scalar_prefetch=0,
            grid=(n_tiles,),
            in_specs=[
                pl.BlockSpec((2, 1, lane_w), lambda i: (0, 0, 0)),
                pl.BlockSpec((2, 1, lane_w), lambda i: (0, 0, 0)),
                pl.BlockSpec((1, lane_w), lambda i: (0, 0)),
                pl.BlockSpec((1, lane_w), lambda i: (0, 0)),
                pl.BlockSpec((tile, lane_w), lambda i: (i, 0)),
            ],
            out_specs=pl.BlockSpec((tile, lane_w), lambda i: (i, 0)),
        ),
        compiler_params=pltpu.CompilerParams(
            dimension_semantics=("parallel",),
            vmem_limit_bytes=vmem_limit),
        cost_estimate=apply_cost,
    )(sums, sqs, gamma, beta, xw)

    if dense:
        out = out.reshape(rows_p, d)
    return out[:rows] if rows_p != rows else out


# --------------------------------------------------------------------------
# Module-equivalent wrapper
# --------------------------------------------------------------------------
class Normalization:
    """JAX/Pallas equivalent of the PyTorch Normalization module (forward pass)."""

    def __init__(self, method: str, d_model: int):
        assert method in ["layer", "batch", "none"]
        self.method = method
        self.d_model = d_model
        # Deterministic, non-trivial affine params so the affine path is exercised.
        self.gamma = (1.0 + 0.01 * jnp.arange(d_model, dtype=jnp.float32)).reshape(1, d_model)
        self.beta = (0.02 * jnp.arange(d_model, dtype=jnp.float32)).reshape(1, d_model)
        # TODO(synk): BatchNorm1d running_mean/var tracking (eval mode) is not
        # implemented; forward matches training-mode batch statistics.

    def __call__(self, x):
        if self.method == "none":
            return x
        b, s, d = x.shape
        assert d == self.d_model
        x2d = x.reshape(b * s, d)
        if self.method == "layer":
            y2d = layernorm_pallas(x2d, self.gamma, self.beta)
        else:  # 'batch'
            y2d = batchnorm_pallas(x2d, self.gamma, self.beta)
        return y2d.reshape(b, s, d)


# --------------------------------------------------------------------------
# Pure-JAX references (correctness checking only)
# --------------------------------------------------------------------------
def _layernorm_ref(x, gamma, beta):
    mean = jnp.mean(x, axis=-1, keepdims=True)
    var = jnp.mean(jnp.square(x - mean), axis=-1, keepdims=True)
    return (x - mean) * jax.lax.rsqrt(var + EPS) * gamma.reshape(-1) + beta.reshape(-1)


def _batchnorm_ref(x, gamma, beta):
    mean = jnp.mean(x, axis=(0, 1), keepdims=True)
    var = jnp.mean(jnp.square(x - mean), axis=(0, 1), keepdims=True)
    return (x - mean) * jax.lax.rsqrt(var + EPS) * gamma.reshape(-1) + beta.reshape(-1)


if __name__ == "__main__":
    key = jax.random.PRNGKey(0)
    B, S, D = 2, 8, 32
    x = jax.random.normal(key, (B, S, D), dtype=jnp.float32)

    # layer norm
    m_layer = Normalization("layer", D)
    y_layer = jax.block_until_ready(m_layer(x))
    assert jnp.allclose(y_layer, _layernorm_ref(x, m_layer.gamma, m_layer.beta),
                        atol=1e-4, rtol=1e-4)

    # batch norm (training-mode batch statistics), lane-dense path (D=32)
    m_batch = Normalization("batch", D)
    y_batch = jax.block_until_ready(m_batch(x))
    assert jnp.allclose(y_batch, _batchnorm_ref(x, m_batch.gamma, m_batch.beta),
                        atol=1e-4, rtol=1e-4)

    # none
    m_none = Normalization("none", D)
    y_none = jax.block_until_ready(m_none(x))
    assert jnp.allclose(y_none, x)

    # exercise padding + natural-layout fallback (D not a divisor of 128, odd rows)
    D2 = 48
    x2 = jax.random.normal(jax.random.PRNGKey(1), (2, 7, D2), dtype=jnp.float32)
    m2b = Normalization("batch", D2)
    y2b = jax.block_until_ready(m2b(x2))
    assert jnp.allclose(y2b, _batchnorm_ref(x2, m2b.gamma, m2b.beta), atol=1e-4, rtol=1e-4)
    m2l = Normalization("layer", D2)
    y2l = jax.block_until_ready(m2l(x2))
    assert jnp.allclose(y2l, _layernorm_ref(x2, m2l.gamma, m2l.beta), atol=1e-4, rtol=1e-4)

    print("KERNEL_OK")
</pallas_src>

<mosaic_0001>
module attributes {stable_mosaic.version = 11 : i64} {
  func.func @_layernorm_kernel(%arg0: i32, %arg1: memref<16x32xf32, #tpu.memory_space<vmem>>, %arg2: memref<1x32xf32, #tpu.memory_space<vmem>>, %arg3: memref<1x32xf32, #tpu.memory_space<vmem>>, %arg4: memref<16x32xf32, #tpu.memory_space<vmem>>) attributes {dimension_semantics = [#tpu.dimension_semantics<parallel>], iteration_bounds = array<i64: 1>, scalar_prefetch = 0 : i64, scratch_operands = 0 : i64, tpu.core_type = #tpu.core_type<tc>, window_params = [{transform_indices = @transform_0, window_bounds = array<i64: 16, 32>}, {pipeline_mode = #tpu.pipeline_mode<synchronous>, transform_indices = @transform_1, window_bounds = array<i64: 1, 32>}, {pipeline_mode = #tpu.pipeline_mode<synchronous>, transform_indices = @transform_2, window_bounds = array<i64: 1, 32>}, {transform_indices = @transform_3, window_bounds = array<i64: 16, 32>}]} {
    %c0 = arith.constant 0 : index
    %c0_0 = arith.constant 0 : index
    %0 = vector.load %arg1[%c0, %c0_0] : memref<16x32xf32, #tpu.memory_space<vmem>>, vector<16x32xf32>
    %cst = arith.constant dense<0.000000e+00> : vector<16xf32>
    %1 = vector.multi_reduction <add>, %0, %cst [1] : vector<16x32xf32> to vector<16xf32>
    %2 = vector.shape_cast %1 : vector<16xf32> to vector<16x1xf32>
    %cst_1 = arith.constant 3.125000e-02 : f32
    %3 = vector.broadcast %cst_1 : f32 to vector<16x1xf32>
    %4 = arith.mulf %2, %3 : vector<16x1xf32>
    %5 = arith.mulf %0, %0 : vector<16x32xf32>
    %cst_2 = arith.constant dense<0.000000e+00> : vector<16xf32>
    %6 = vector.multi_reduction <add>, %5, %cst_2 [1] : vector<16x32xf32> to vector<16xf32>
    %7 = vector.shape_cast %6 : vector<16xf32> to vector<16x1xf32>
    %cst_3 = arith.constant 3.125000e-02 : f32
    %8 = vector.broadcast %cst_3 : f32 to vector<16x1xf32>
    %9 = arith.mulf %7, %8 : vector<16x1xf32>
    %10 = arith.mulf %4, %4 : vector<16x1xf32>
    %11 = arith.subf %9, %10 : vector<16x1xf32>
    %cst_4 = arith.constant 0.000000e+00 : f32
    %12 = vector.broadcast %cst_4 : f32 to vector<16x1xf32>
    %13 = arith.maximumf %11, %12 : vector<16x1xf32>
    %cst_5 = arith.constant 9.99999974E-6 : f32
    %14 = vector.broadcast %cst_5 : f32 to vector<16x1xf32>
    %15 = arith.addf %13, %14 : vector<16x1xf32>
    %16 = math.rsqrt %15 : vector<16x1xf32>
    %17 = vector.broadcast %4 : vector<16x1xf32> to vector<16x32xf32>
    %18 = arith.subf %0, %17 : vector<16x32xf32>
    %19 = vector.broadcast %16 : vector<16x1xf32> to vector<16x32xf32>
    %20 = arith.mulf %18, %19 : vector<16x32xf32>
    %c0_6 = arith.constant 0 : index
    %c0_7 = arith.constant 0 : index
    %21 = vector.load %arg2[%c0_6, %c0_7] : memref<1x32xf32, #tpu.memory_space<vmem>>, vector<1x32xf32>
    %22 = vector.broadcast %21 : vector<1x32xf32> to vector<16x32xf32>
    %23 = arith.mulf %20, %22 : vector<16x32xf32>
    %c0_8 = arith.constant 0 : index
    %c0_9 = arith.constant 0 : index
    %24 = vector.load %arg3[%c0_8, %c0_9] : memref<1x32xf32, #tpu.memory_space<vmem>>, vector<1x32xf32>
    %25 = vector.broadcast %24 : vector<1x32xf32> to vector<16x32xf32>
    %26 = arith.addf %23, %25 : vector<16x32xf32>
    %c0_10 = arith.constant 0 : index
    %c0_11 = arith.constant 0 : index
    %27 = vector.load %arg4[%c0_10, %c0_11] : memref<16x32xf32, #tpu.memory_space<vmem>>, vector<16x32xf32>
    tpu.vector_store %arg4[%c0_10, %c0_11], %26 {strides = array<i32>} : memref<16x32xf32, #tpu.memory_space<vmem>>, vector<16x32xf32>,
    return
  }
  func.func @transform_0(%arg0: i32) -> (i32, i32) {
    %c0_i32 = arith.constant 0 : i32
    %c0_i32_0 = arith.constant 0 : i32
    return %arg0, %c0_i32 : i32, i32
  }
  func.func @transform_1(%arg0: i32) -> (i32, i32) {
    %c0_i32 = arith.constant 0 : i32
    %c0_i32_0 = arith.constant 0 : i32
    %c0_i32_1 = arith.constant 0 : i32
    return %c0_i32, %c0_i32_0 : i32, i32
  }
  func.func @transform_2(%arg0: i32) -> (i32, i32) {
    %c0_i32 = arith.constant 0 : i32
    %c0_i32_0 = arith.constant 0 : i32
    %c0_i32_1 = arith.constant 0 : i32
    return %c0_i32, %c0_i32_0 : i32, i32
  }
  func.func @transform_3(%arg0: i32) -> (i32, i32) {
    %c0_i32 = arith.constant 0 : i32
    %c0_i32_0 = arith.constant 0 : i32
    return %arg0, %c0_i32 : i32, i32
  }
}

</mosaic_0001>

<llo_original>
// kernel: tpu_custom_call.1
$region0: #{tpu_custom_call.1}
  #allocation0 [shape = 'u32[]', space=smem, size = 0x4, offset = 0x4, fixed_abs, tag = 'smem constant byte address 0x4 - core index']
  #allocation1 [shape = 'u32[144,128]{1,0:T(1,128)}', space=vmem, size = 0x12000, scoped, tag = 'internal scratch']
  %s0 = inlined_call_operand.hbm [shape: f32[16,32], index: 0, kind: input, shape index: {}]
  %s1 = inlined_call_operand.vmem [shape: f32[1,32], index: 1, kind: input, shape index: {}]
  %s2 = inlined_call_operand.vmem [shape: f32[1,32], index: 2, kind: input, shape index: {}]
  %s3 = inlined_call_operand.hbm [shape: f32[16,32], index: 3, kind: output, shape index: {}]
  %s4 = sld [smem:[#allocation0]]
  $region26: #{tpu_custom_call.1} parent=0
    _
  %s6 = ssub.s32 1, %s4
  %s7 = scalar_select 0, %s6, %s4
  $region1: #{tpu_custom_call.1} parent=0
    #allocation2 [shape = 'u8[8192]{0}', space=vmem, size = 0x2000, scoped, tag = 'input window, operand 0, single buffered']
    #allocation3 [shape = 's32[1]{0}', space=sflag, size = 0x4, scoped, tag = 'scoped memory for tpu_custom_call.1']
    #allocation4 [shape = 's32[1]{0}', space=sflag, size = 0x4, scoped, tag = 'scoped memory for tpu_custom_call.1']
    #allocation5 [shape = 'u8[8192]{0}', space=vmem, size = 0x2000, scoped, tag = 'output window, operand 0, single buffered']
    %8 = vsyncpa [#allocation3], 0
    %9 = vsyncpa [#allocation4], 0
    // Predicated region
    $region2: #{tpu_custom_call.1} parent=1 // pred_check
      _
    $region3: #{tpu_custom_call.1} parent=1 // pred_check_branch
      %11 = sbr.rel (0) target = $region5
    $region4: #{tpu_custom_call.1} parent=1 // pred_region
      %s13 = ssub.s32 256, 256
      %14 = vsyncadd [#allocation3], %s13
      %s15 = sshll.u32 [#allocation2], 4
      %s16 = int_to_ptr.vmem [resolvable:$true] %s15
      %21 = dma.hbm_to_vmem [thread:$0]  %s0, 256, %s16, [#allocation3], 128, 128, 8
    $region5: #{tpu_custom_call.1} parent=1 // pred_fallthru
      _
    // Predicated region
    $region6: #{tpu_custom_call.1} parent=1 // pred_check
      _
    $region7: #{tpu_custom_call.1} parent=1 // pred_check_branch
      %23 = sbr.rel (0) target = $region9
    $region8: #{tpu_custom_call.1} parent=1 // pred_region
      _
    $region9: #{tpu_custom_call.1} parent=1 // pred_fallthru
      _
    // Predicated region
    $region10: #{tpu_custom_call.1} parent=1 // pred_check
      _
    $region11: #{tpu_custom_call.1} parent=1 // pred_check_branch
      %25 = sbr.rel (0) target = $region13
    $region12: #{tpu_custom_call.1} parent=1 // pred_region
      _
    $region13: #{tpu_custom_call.1} parent=1 // pred_fallthru
      _
    // Predicated region
    $region14: #{tpu_custom_call.1} parent=1 // pred_check
      _
    $region15: #{tpu_custom_call.1} parent=1 // pred_check_branch
      %27 = sbr.rel (0) target = $region17
    $region16: #{tpu_custom_call.1} parent=1 // pred_region
      %28 = dma.done [#allocation3], 256
    $region17: #{tpu_custom_call.1} parent=1 // pred_fallthru
      _
    %v29 = vld [vmem:[#allocation2] sm:$0xff]
    %v30 = vld [vmem:[#allocation2 + $0x8] sm:$0xff]
    %vm31 = vcmask 261120
    %v32 = vsel %vm31, %v29, 0.0
    %33 = vadd.xlane.f32.xlu0 %v32
    %v34 = vpop.xlane.xlu0 %33
    %v35 = vsel %vm31, %v30, 0.0
    %36 = vadd.xlane.f32.xlu0 %v35
    %v37 = vpop.xlane.xlu0 %36
    %v38 = vmul.f32 %v34, 0.03125
    %v39 = vmul.f32 %v37, 0.03125
    %v40 = vmul.f32 %v29, %v29
    %v41 = vmul.f32 %v30, %v30
    %v42 = vsel %vm31, %v40, 0.0
    %43 = vadd.xlane.f32.xlu0 %v42
    %v44 = vpop.xlane.xlu0 %43
    %v45 = vsel %vm31, %v41, 0.0
    %46 = vadd.xlane.f32.xlu0 %v45
    %v47 = vpop.xlane.xlu0 %46
    %v48 = vmul.f32 %v44, 0.03125
    %v49 = vmul.f32 %v47, 0.03125
    %v50 = vmul.f32 %v38, %v38
    %v51 = vmul.f32 %v39, %v39
    %v52 = vsub.f32 %v48, %v50
    %v53 = vsub.f32 %v49, %v51
    %v54 = vmax.f32 %v52, 0.0
    %v55 = vmax.f32 %v53, 0.0
    %v56 = vadd.f32 %v54, 1e-05
    %v57 = vadd.f32 %v55, 1e-05
    %v58 = vrsqrt.pop %v56
    %v59 = vrsqrt.pop %v57
    %v60 = vsub.f32 %v29, %v38
    %v61 = vsub.f32 %v30, %v39
    %v62 = vmul.f32 %v60, %v58
    %v63 = vmul.f32 %v61, %v59
    %v64 = vld [vmem:[%s1] sm:$0x1]
    %v66 = vlaneseq
    %v67 = vshrl.u32 %v66, 7
    %v68 = vsub.s32 0, %v67
    %v69 = vrot.slane %v64, %v68
    %v71 = vmul.f32 %v62, %v69
    %v72 = vmul.f32 %v63, %v69
    %v73 = vld [vmem:[%s2] sm:$0x1]
    %v75 = vlaneseq
    %v76 = vshrl.u32 %v75, 7
    %v77 = vsub.s32 0, %v76
    %v78 = vrot.slane %v73, %v77
    %v80 = vadd.f32 %v71, %v78
    %v81 = vadd.f32 %v72, %v78
    %82 = vst.msk [vmem:[#allocation5] sm:$0xff] %vm31, %v80
    %83 = vst.msk [vmem:[#allocation5 + $0x8] sm:$0xff] %vm31, %v81
    // Predicated region
    $region18: #{tpu_custom_call.1} parent=1 // pred_check
      _
    $region19: #{tpu_custom_call.1} parent=1 // pred_check_branch
      %85 = sbr.rel (0) target = $region21
    $region20: #{tpu_custom_call.1} parent=1 // pred_region
      %s87 = ssub.s32 256, 256
      %88 = vsyncadd [#allocation4], %s87
      %s89 = sshll.u32 [#allocation5], 4
      %s90 = int_to_ptr.vmem [resolvable:$true] %s89
      %95 = dma.vmem_to_hbm [thread:$0]  %s90, 256, %s3, [#allocation4], 128, 128, 8
    $region21: #{tpu_custom_call.1} parent=1 // pred_fallthru
      _
    // Predicated region
    $region22: #{tpu_custom_call.1} parent=1 // pred_check
      _
    $region23: #{tpu_custom_call.1} parent=1 // pred_check_branch
      %97 = sbr.rel (0) target = $region25
    $region24: #{tpu_custom_call.1} parent=1 // pred_region
      %98 = dma.done [#allocation4], 256
    $region25: #{tpu_custom_call.1} parent=1 // pred_fallthru
      _
    %99 = vsyncpa [#allocation3], 1
    %100 = vsyncpa [#allocation4], 1

</llo_original>
